<compile_context>
chip_gen: v5e
topology: v5e:2x2
jax: 0.10.0
libtpu: 0.0.40
codegen_flags: <defaults>
</compile_context>

<pallas_src>
import functools

import jax
import jax.numpy as jnp
from jax import lax
from jax.experimental import pallas as pl
from jax.experimental.pallas import tpu as pltpu

HIDDEN_SIZE = 48


def _round_up(n, m):
    return ((n + m - 1) // m) * m


def _critic_kernel(x_ref, w1t_ref, aux_ref, b2_ref, o_ref):
    # x_ref:   (tile, obs)    activations, native (batch, obs) layout
    # w1t_ref: (hid_pad, obs) first-layer weights, hidden on sublanes
    #                         (dtype bf16 or f32 -> selects MXU input precision)
    # aux_ref: (hid_pad, 2)   column 0 = b1, column 1 = w2   (f32)
    # b2_ref:  (1,) in SMEM   final scalar bias
    # o_ref:   (1, tile)      lane-dense output, batch on lanes
    x = x_ref[...].astype(w1t_ref.dtype)          # cheap VPU cast (bf16 path)

    # Contract over obs (axis 1 of both operands):
    #   (hid_pad, obs) . (tile, obs)^T -> (hid_pad, tile), f32 accumulate.
    # Batch lands on the lane axis so the output tile is lane-dense.
    h = lax.dot_general(w1t_ref[...], x, (((1,), (1,)), ((), ())),
                        preferred_element_type=jnp.float32)

    b1 = aux_ref[:, 0:1]                          # (hid_pad, 1) f32
    w2 = aux_ref[:, 1:2]                          # (hid_pad, 1) f32
    h = jnp.maximum(h + b1, 0.0)                  # bias + ReLU on the VPU (f32)

    # Second layer (out_features == 1): VPU multiply + cross-sublane reduction
    # on the XLU, plus the scalar output bias from SMEM.
    out = jnp.sum(h * w2, axis=0, keepdims=True) + b2_ref[0]   # (1, tile)
    o_ref[...] = out.astype(o_ref.dtype)


def prepare_critic_params(w1, b1, w2, b2, *, use_bf16_matmul=True):
    """One-time weight re-layout. Call at init, NOT per forward.

    w1: (obs, hid), b1: (hid,), w2: (hid, 1), b2: (1,).
    Returns (w1t, aux, b2s) ready for critic_forward.
    Zero-padding of the hidden dim is exact: ReLU(0) = 0 and zero w2 rows
    contribute nothing.
    """
    obs, hid = w1.shape
    hid_pad = _round_up(hid, 8)                   # sublane multiple
    mxu_dtype = jnp.bfloat16 if use_bf16_matmul else jnp.float32
    w1t = (jnp.zeros((hid_pad, obs), jnp.float32)
           .at[:hid, :].set(jnp.asarray(w1, jnp.float32).T)
           .astype(mxu_dtype))
    aux = (jnp.zeros((hid_pad, 2), jnp.float32)
           .at[:hid, 0].set(jnp.asarray(b1, jnp.float32))
           .at[:hid, 1].set(jnp.asarray(w2, jnp.float32)[:, 0]))
    b2s = jnp.asarray(b2, jnp.float32).reshape((1,))
    return w1t, aux, b2s


@functools.partial(jax.jit, static_argnames=("tile_b",))
def critic_forward(x, w1t, aux, b2s, *, tile_b=8192):
    """x: (B, obs) f32; (w1t, aux, b2s) from prepare_critic_params.

    Returns (B, 1, 1) float32, matching the PyTorch module's forward.
    """
    B, obs = x.shape
    hid_pad = w1t.shape[0]

    if B <= 128:
        # Latency path (typical RL critic call, e.g. B=2): a single block that
        # exactly matches the array shapes -> no padding, no extra data movement.
        tile = B
        grid_steps = 1
        out_lanes = B
    else:
        # Throughput path:
        #  * >= 2 grid steps so the "parallel" axis feeds both v7x TensorCores,
        #  * tile a multiple of 128 that (nearly) divides round_up(B, 128) so
        #    padded-column waste stays small (last block is a partial block),
        #  * tile capped at tile_b so 2x x-buffers (+lane padding) + the
        #    (hid_pad, tile) f32 intermediates stay well under 32 MiB VMEM.
        b_ceil = _round_up(B, 128)
        n_blocks = max(pl.cdiv(b_ceil, tile_b), 2)
        tile = _round_up(pl.cdiv(b_ceil, n_blocks), 128)
        grid_steps = pl.cdiv(B, tile)
        out_lanes = grid_steps * tile             # every output block stays full / lane-dense

    out = pl.pallas_call(
        _critic_kernel,
        out_shape=jax.ShapeDtypeStruct((1, out_lanes), jnp.float32),
        grid=(grid_steps,),
        in_specs=[
            pl.BlockSpec((tile, obs), lambda i: (i, 0)),        # x tile, native layout
            pl.BlockSpec((hid_pad, obs), lambda i: (0, 0)),     # weights stay resident
            pl.BlockSpec((hid_pad, 2), lambda i: (0, 0)),       # merged (b1 | w2)
            pl.BlockSpec(memory_space=pltpu.MemorySpace.SMEM),  # b2 scalar in SMEM
        ],
        out_specs=pl.BlockSpec((1, tile), lambda i: (0, i)),    # lane-dense output
        compiler_params=pltpu.CompilerParams(
            dimension_semantics=("parallel",),                  # shards across TCs on v7x
            vmem_limit_bytes=32 * 1024 * 1024,
        ),
    )(x, w1t, aux, b2s)

    # Padded batch columns compute ReLU(b1).w2 + b2 != 0; the :B slice below is
    # what keeps the result correct -- do not drop it when refactoring.
    return out[0, :B].reshape(B, 1, 1)


def init_params(key, obs_size, hidden, out_dim):
    """Deterministic init mimicking torch.nn.Linear default (U(-1/sqrt(fan_in), +))."""
    k1, k2, k3, k4 = jax.random.split(key, 4)
    bound1 = 1.0 / jnp.sqrt(obs_size)
    bound2 = 1.0 / jnp.sqrt(hidden)
    w1 = jax.random.uniform(k1, (obs_size, hidden), jnp.float32, -bound1, bound1)
    b1 = jax.random.uniform(k2, (hidden,), jnp.float32, -bound1, bound1)
    w2 = jax.random.uniform(k3, (hidden, out_dim), jnp.float32, -bound2, bound2)
    b2 = jax.random.uniform(k4, (out_dim,), jnp.float32, -bound2, bound2)
    return w1, b1, w2, b2


def _reference(x, w1, b1, w2, b2):
    h = jnp.maximum(x @ w1 + b1, 0.0)
    return (h @ w2 + b2).reshape(x.shape[0], 1, 1)


if __name__ == "__main__":
    key = jax.random.PRNGKey(0)
    kx, kp, kx2 = jax.random.split(key, 3)

    OBS_SIZE = 32
    w1, b1, w2, b2 = init_params(kp, OBS_SIZE, HIDDEN_SIZE, 1)

    # ---- exact f32-MXU path: tight check against the pure-JAX reference ----
    p_f32 = prepare_critic_params(w1, b1, w2, b2, use_bf16_matmul=False)

    B = 2                                    # typical RL critic call (latency path)
    x = jax.random.normal(kx, (B, OBS_SIZE), dtype=jnp.float32)
    out = jax.block_until_ready(critic_forward(x, *p_f32))
    ref = _reference(x, w1, b1, w2, b2)
    assert out.shape == (B, 1, 1)
    assert jnp.allclose(out, ref, atol=1e-5, rtol=1e-5)

    B2 = 300                                 # multi-block / partial-last-block path
    x2 = jax.random.normal(kx2, (B2, OBS_SIZE), dtype=jnp.float32)
    out2 = jax.block_until_ready(critic_forward(x2, *p_f32))
    ref2 = _reference(x2, w1, b1, w2, b2)
    assert out2.shape == (B2, 1, 1)
    assert jnp.allclose(out2, ref2, atol=1e-5, rtol=1e-5)

    # ---- default bf16-MXU path (f32 accumulate): looser tolerance ----
    # TODO(synk): confirm bf16 MXU inputs (~1e-3 relative error) are acceptable
    # for the RL training loop; pass use_bf16_matmul=False otherwise.
    p_bf16 = prepare_critic_params(w1, b1, w2, b2)       # use_bf16_matmul=True
    out_bf = jax.block_until_ready(critic_forward(x2, *p_bf16))
    assert out_bf.shape == (B2, 1, 1)
    assert jnp.allclose(out_bf, ref2, atol=2e-2, rtol=2e-2)

    out_bf_small = jax.block_until_ready(critic_forward(x, *p_bf16))
    assert out_bf_small.shape == (B, 1, 1)
    assert jnp.allclose(out_bf_small, ref, atol=2e-2, rtol=2e-2)

    print("KERNEL_OK")
</pallas_src>

<mosaic_0001>
module attributes {stable_mosaic.version = 11 : i64} {
  func.func @_critic_kernel(%arg0: i32, %arg1: memref<2x32xf32, #tpu.memory_space<vmem>>, %arg2: memref<48x32xf32, #tpu.memory_space<vmem>>, %arg3: memref<48x2xf32, #tpu.memory_space<vmem>>, %arg4: memref<1xf32, #tpu.memory_space<smem>>, %arg5: memref<1x2xf32, #tpu.memory_space<vmem>>) attributes {dimension_semantics = [#tpu.dimension_semantics<parallel>], iteration_bounds = array<i64: 1>, scalar_prefetch = 0 : i64, scratch_operands = 0 : i64, tpu.core_type = #tpu.core_type<tc>, window_params = [{transform_indices = @transform_0, window_bounds = array<i64: 2, 32>}, {pipeline_mode = #tpu.pipeline_mode<synchronous>, transform_indices = @transform_1, window_bounds = array<i64: 48, 32>}, {pipeline_mode = #tpu.pipeline_mode<synchronous>, transform_indices = @transform_2, window_bounds = array<i64: 48, 2>}, {transform_indices = @transform_3, window_bounds = array<i64: 1>}, {transform_indices = @transform_4, window_bounds = array<i64: 1, 2>}]} {
    %c0 = arith.constant 0 : index
    %c0_0 = arith.constant 0 : index
    %0 = vector.load %arg1[%c0, %c0_0] : memref<2x32xf32, #tpu.memory_space<vmem>>, vector<2x32xf32>
    %c0_1 = arith.constant 0 : index
    %c0_2 = arith.constant 0 : index
    %1 = vector.load %arg2[%c0_1, %c0_2] : memref<48x32xf32, #tpu.memory_space<vmem>>, vector<48x32xf32>
    %cst = arith.constant dense<0.000000e+00> : vector<48x2xf32>
    %2 = tpu.matmul %1, %0, %cst {dimension_numbers = #tpu.dot_dimension_numbers<[1], [1], [0], [0], [0, 0, 1, 0], [], []>} : vector<48x32xf32>, vector<2x32xf32>, vector<48x2xf32> -> vector<48x2xf32>
    %c0_3 = arith.constant 0 : index
    %c0_4 = arith.constant 0 : index
    %3 = vector.load %arg3[%c0_3, %c0_4] : memref<48x2xf32, #tpu.memory_space<vmem>>, vector<48x1xf32>
    %c0_5 = arith.constant 0 : index
    %c1 = arith.constant 1 : index
    %4 = vector.load %arg3[%c0_5, %c1] : memref<48x2xf32, #tpu.memory_space<vmem>>, vector<48x1xf32>
    %5 = vector.broadcast %3 : vector<48x1xf32> to vector<48x2xf32>
    %6 = arith.addf %2, %5 : vector<48x2xf32>
    %cst_6 = arith.constant 0.000000e+00 : f32
    %7 = vector.broadcast %cst_6 : f32 to vector<48x2xf32>
    %8 = arith.maximumf %6, %7 : vector<48x2xf32>
    %9 = vector.broadcast %4 : vector<48x1xf32> to vector<48x2xf32>
    %10 = arith.mulf %8, %9 : vector<48x2xf32>
    %cst_7 = arith.constant dense<0.000000e+00> : vector<2xf32>
    %11 = vector.multi_reduction <add>, %10, %cst_7 [0] : vector<48x2xf32> to vector<2xf32>
    %12 = vector.shape_cast %11 : vector<2xf32> to vector<1x2xf32>
    %c0_8 = arith.constant 0 : index
    %13 = memref.load %arg4[%c0_8] : memref<1xf32, #tpu.memory_space<smem>>
    %14 = vector.broadcast %13 : f32 to vector<1x2xf32>
    %15 = arith.addf %12, %14 : vector<1x2xf32>
    %c0_9 = arith.constant 0 : index
    %c0_10 = arith.constant 0 : index
    %16 = vector.load %arg5[%c0_9, %c0_10] : memref<1x2xf32, #tpu.memory_space<vmem>>, vector<1x2xf32>
    tpu.vector_store %arg5[%c0_9, %c0_10], %15 {strides = array<i32>} : memref<1x2xf32, #tpu.memory_space<vmem>>, vector<1x2xf32>,
    return
  }
  func.func @transform_0(%arg0: i32) -> (i32, i32) {
    %c0_i32 = arith.constant 0 : i32
    %c0_i32_0 = arith.constant 0 : i32
    return %arg0, %c0_i32 : i32, i32
  }
  func.func @transform_1(%arg0: i32) -> (i32, i32) {
    %c0_i32 = arith.constant 0 : i32
    %c0_i32_0 = arith.constant 0 : i32
    %c0_i32_1 = arith.constant 0 : i32
    return %c0_i32, %c0_i32_0 : i32, i32
  }
  func.func @transform_2(%arg0: i32) -> (i32, i32) {
    %c0_i32 = arith.constant 0 : i32
    %c0_i32_0 = arith.constant 0 : i32
    %c0_i32_1 = arith.constant 0 : i32
    return %c0_i32, %c0_i32_0 : i32, i32
  }
  func.func @transform_3(%arg0: i32) -> i32 {
    %c0_i32 = arith.constant 0 : i32
    %c0_i32_0 = arith.constant 0 : i32
    return %c0_i32 : i32
  }
  func.func @transform_4(%arg0: i32) -> (i32, i32) {
    %c0_i32 = arith.constant 0 : i32
    %c0_i32_0 = arith.constant 0 : i32
    return %c0_i32, %arg0 : i32, i32
  }
}

</mosaic_0001>

<llo_original>
// kernel: critic_forward.1
$region0: #{critic_forward.1}
  #allocation0 [shape = 'u32[]', space=smem, size = 0x4, offset = 0x4, fixed_abs, tag = 'smem constant byte address 0x4 - core index']
  #allocation1 [shape = 'u32[72,128]{1,0:T(1,128)}', space=vmem, size = 0x9000, scoped, tag = 'internal scratch']
  #allocation2 [shape = 'f32[1]{0:T(128)S(6)}', space=smem, size = 0x200, scoped, tag = 'scoped memory for critic_forward.1']
  %s0 = inlined_call_operand.vmem [shape: f32[2,32], index: 0, kind: input, shape index: {}]
  %s1 = inlined_call_operand.vmem [shape: f32[48,32], index: 1, kind: input, shape index: {}]
  %s2 = inlined_call_operand.vmem [shape: f32[48,2], index: 2, kind: input, shape index: {}]
  %s3 = inlined_call_operand.<no memory space> [shape: f32[1], index: 3, kind: input, shape index: {}]
  %s4 = inlined_call_operand.hbm [shape: f32[1,2], index: 4, kind: output, shape index: {}]
  %s5 = sld [smem:[#allocation0]]
  $region26: #{critic_forward.1} parent=0
    _
  %s7 = ssub.s32 1, %s5
  %s8 = scalar_select 0, %s7, %s5
  %9 = sst [smem:[#allocation2]] %s3
  $region1: #{critic_forward.1} parent=0
    #allocation3 [shape = 'u8[512]{0}', space=vmem, size = 0x400, scoped, tag = 'output window, operand 0, single buffered']
    #allocation4 [shape = 's32[1]{0}', space=sflag, size = 0x4, scoped, tag = 'scoped memory for critic_forward.1']
    %10 = vsyncpa [#allocation4], 0
    // Predicated region
    $region2: #{critic_forward.1} parent=1 // pred_check
      _
    $region3: #{critic_forward.1} parent=1 // pred_check_branch
      %12 = sbr.rel (0) target = $region5
    $region4: #{critic_forward.1} parent=1 // pred_region
      _
    $region5: #{critic_forward.1} parent=1 // pred_fallthru
      _
    // Predicated region
    $region6: #{critic_forward.1} parent=1 // pred_check
      _
    $region7: #{critic_forward.1} parent=1 // pred_check_branch
      %14 = sbr.rel (0) target = $region9
    $region8: #{critic_forward.1} parent=1 // pred_region
      _
    $region9: #{critic_forward.1} parent=1 // pred_fallthru
      _
    // Predicated region
    $region10: #{critic_forward.1} parent=1 // pred_check
      _
    $region11: #{critic_forward.1} parent=1 // pred_check_branch
      %16 = sbr.rel (0) target = $region13
    $region12: #{critic_forward.1} parent=1 // pred_region
      _
    $region13: #{critic_forward.1} parent=1 // pred_fallthru
      _
    // Predicated region
    $region14: #{critic_forward.1} parent=1 // pred_check
      _
    $region15: #{critic_forward.1} parent=1 // pred_check_branch
      %18 = sbr.rel (0) target = $region17
    $region16: #{critic_forward.1} parent=1 // pred_region
      _
    $region17: #{critic_forward.1} parent=1 // pred_fallthru
      _
    %v19 = vld [vmem:[%s0] sm:$0x3]
    %v20 = vld [vmem:[%s1] sm:$0xff]
    %v21 = vld [vmem:[%s1 + $0x8] sm:$0xff]
    %v22 = vld [vmem:[%s1 + $0x10] sm:$0xff]
    %v23 = vld [vmem:[%s1 + $0x18] sm:$0xff]
    %v24 = vld [vmem:[%s1 + $0x20] sm:$0xff]
    %v25 = vld [vmem:[%s1 + $0x28] sm:$0xff]
    %v26 = vld [vmem:[%s2] sm:$0xff]
    %v27 = vld [vmem:[%s2 + $0x8] sm:$0xff]
    %v28 = vld [vmem:[%s2 + $0x10] sm:$0xff]
    %v29 = vld [vmem:[%s2 + $0x18] sm:$0xff]
    %v30 = vld [vmem:[%s2 + $0x20] sm:$0xff]
    %v31 = vld [vmem:[%s2 + $0x28] sm:$0xff]
    %33 = vset.pattern.permute.xlu0 0
    %34 = vperm.xlu0 %33, %v26
    %v35 = vpop.permute.xlu0 %34
    %38 = vset.pattern.permute.xlu0 0
    %39 = vperm.xlu0 %38, %v27
    %v40 = vpop.permute.xlu0 %39
    %43 = vset.pattern.permute.xlu0 0
    %44 = vperm.xlu0 %43, %v28
    %v45 = vpop.permute.xlu0 %44
    %48 = vset.pattern.permute.xlu0 0
    %49 = vperm.xlu0 %48, %v29
    %v50 = vpop.permute.xlu0 %49
    %53 = vset.pattern.permute.xlu0 0
    %54 = vperm.xlu0 %53, %v30
    %v55 = vpop.permute.xlu0 %54
    %58 = vset.pattern.permute.xlu0 0
    %59 = vperm.xlu0 %58, %v31
    %v60 = vpop.permute.xlu0 %59
    %vm62 = vcmask 261120
    %v64 = vsel %vm62, %v20, 0
    %v67 = vsel %vm62, %v21, 0
    %v70 = vsel %vm62, %v22, 0
    %v73 = vsel %vm62, %v23, 0
    %v76 = vsel %vm62, %v24, 0
    %v79 = vsel %vm62, %v25, 0
    %v82 = vsel %vm62, %v19, 0
    %84 = vmatpush.xpose.msra.mxu0 0.0
    %85 = vmatpush.xpose.msra.mxu0 0.0
    %86 = vmatpush.xpose.msra.mxu0 0.0
    %87 = vmatpush.xpose.msra.mxu0 0.0
    %88 = vmatpush.xpose.msra.mxu0 0.0
    %89 = vmatpush.xpose.msra.mxu0 0.0
    %90 = vmatpush.xpose.msra.mxu0 0.0
    %91 = vmatpush.xpose.msra.mxu0 0.0
    %92 = vmatpush.xpose.msra.mxu0 0.0
    %93 = vmatpush.xpose.msra.mxu0 0.0
    %94 = vmatpush.xpose.msra.mxu0 0.0
    %95 = vmatpush.xpose.msra.mxu0 0.0
    %96 = vmatpush.xpose.msra.mxu0 0.0
    %97 = vmatpush.xpose.msra.mxu0 0.0
    %98 = vmatpush.xpose.msra.mxu0 0.0
    %99 = vmatpush.xpose.msra.mxu0 %v82
    %100 = vmatmul.f32.gmra.mxu0 %v64
    %v101 = vpop.f32.mrf.mxu0
    %v102 = vadd.f32 %v35, %v101
    %103 = vmatmul.f32.gmra.mxu0 %v67
    %v104 = vpop.f32.mrf.mxu0
    %v105 = vadd.f32 %v40, %v104
    %106 = vmatmul.f32.gmra.mxu0 %v70
    %v107 = vpop.f32.mrf.mxu0
    %v108 = vadd.f32 %v45, %v107
    %109 = vmatmul.f32.gmra.mxu0 %v73
    %v110 = vpop.f32.mrf.mxu0
    %v111 = vadd.f32 %v50, %v110
    %112 = vmatmul.f32.gmra.mxu0 %v76
    %v113 = vpop.f32.mrf.mxu0
    %v114 = vadd.f32 %v55, %v113
    %115 = vmatmul.f32.gmra.mxu0 %v79
    %v116 = vpop.f32.mrf.mxu0
    %v117 = vadd.f32 %v60, %v116
    %118 = vdwg.mxu0
    %v119 = vmax.f32 %v102, 0.0
    %v120 = vmax.f32 %v105, 0.0
    %v121 = vmax.f32 %v108, 0.0
    %v122 = vmax.f32 %v111, 0.0
    %v123 = vmax.f32 %v114, 0.0
    %v124 = vmax.f32 %v117, 0.0
    %125 = vset.pattern.permute.xlu0 1
    %126 = vperm.xlu0 %125, %v26
    %v127 = vpop.permute.xlu0 %126
    %129 = vset.pattern.permute.xlu0 1
    %130 = vperm.xlu0 %129, %v27
    %v131 = vpop.permute.xlu0 %130
    %133 = vset.pattern.permute.xlu0 1
    %134 = vperm.xlu0 %133, %v28
    %v135 = vpop.permute.xlu0 %134
    %137 = vset.pattern.permute.xlu0 1
    %138 = vperm.xlu0 %137, %v29
    %v139 = vpop.permute.xlu0 %138
    %141 = vset.pattern.permute.xlu0 1
    %142 = vperm.xlu0 %141, %v30
    %v143 = vpop.permute.xlu0 %142
    %145 = vset.pattern.permute.xlu0 1
    %146 = vperm.xlu0 %145, %v31
    %v147 = vpop.permute.xlu0 %146
    %v149 = vmul.f32 %v119, %v127
    %v150 = vmul.f32 %v120, %v131
    %v151 = vmul.f32 %v121, %v135
    %v152 = vmul.f32 %v122, %v139
    %v153 = vmul.f32 %v123, %v143
    %v154 = vmul.f32 %v124, %v147
    %vm155 = vcmask 15360
    %v156 = vsel %vm155, %v149, 0.0
    %v157 = vsel %vm155, %v150, 0.0
    %v158 = vadd.f32 %v156, %v157
    %v159 = vsel %vm155, %v151, 0.0
    %v160 = vadd.f32 %v158, %v159
    %v161 = vsel %vm155, %v152, 0.0
    %v162 = vadd.f32 %v160, %v161
    %v163 = vsel %vm155, %v153, 0.0
    %v164 = vadd.f32 %v162, %v163
    %v165 = vsel %vm155, %v154, 0.0
    %v166 = vadd.f32 %v164, %v165
    %v167 = vrot.slane %v166, 4
    %v168 = vadd.f32 %v166, %v167
    %v169 = vrot.slane %v168, 2
    %v170 = vadd.f32 %v168, %v169
    %v171 = vrot.slane %v170, 1
    %v172 = vadd.f32 %v170, %v171
    %s173 = sld [smem:[#allocation2]]
    %v174 = vstv %s173
    %v175 = vadd.f32 %v172, %v174
    %vm176 = vcmask 8192
    %177 = vst.msk [vmem:[#allocation3] sm:$0x1] %vm176, %v175
    // Predicated region
    $region18: #{critic_forward.1} parent=1 // pred_check
      _
    $region19: #{critic_forward.1} parent=1 // pred_check_branch
      %179 = sbr.rel (0) target = $region21
    $region20: #{critic_forward.1} parent=1 // pred_region
      %181 = vsyncadd [#allocation4], 0
      %s183 = sshll.u32 [#allocation3], 4
      %s184 = int_to_ptr.vmem [resolvable:$true] %s183
      %s185 = sshll.u32 %s4, 4
      %s186 = int_to_ptr.hbm [resolvable:$true] %s185
      %188 = dma.vmem_to_hbm [thread:$0]  %s184, 16, %s186, [#allocation4]
    $region21: #{critic_forward.1} parent=1 // pred_fallthru
      _
    // Predicated region
    $region22: #{critic_forward.1} parent=1 // pred_check
      _
    $region23: #{critic_forward.1} parent=1 // pred_check_branch
      %190 = sbr.rel (0) target = $region25
    $region24: #{critic_forward.1} parent=1 // pred_region
      %192 = dma.done [#allocation4], 16
    $region25: #{critic_forward.1} parent=1 // pred_fallthru
      _
    %193 = vsyncpa [#allocation4], 1

</llo_original>
